<compile_context>
chip_gen: v5e
topology: v5e:2x2
jax: 0.10.0
libtpu: 0.0.40
codegen_flags: <defaults>
</compile_context>

<pallas_src>
import jax
import jax.numpy as jnp
import numpy as np
from jax.experimental import pallas as pl
from jax.experimental.pallas import tpu as pltpu

IN_FEATURES = 256      # nn.Linear(256, 128)
HIDDEN = 128
LEAKY_SLOPE = 0.01     # nn.LeakyReLU() default negative_slope
NEG_SENTINEL = -1e30   # baked into padded class columns of b2
_VMEM_BUDGET = 24 * 1024 * 1024   # stay well under v7x's 32 MiB scoped default


def _round_up(x, m):
    return ((x + m - 1) // m) * m


def _vmem_bytes(tb, c_pad):
    """Conservative VMEM footprint estimate (everything double-buffered)."""
    weights = (IN_FEATURES * HIDDEN + HIDDEN + HIDDEN * c_pad + c_pad) * 4
    io = 2 * tb * (IN_FEATURES + c_pad) * 4      # x tile + out tile, 2 bufs each
    return 2 * weights + io


def _choose_batch_tile(B, c_pad):
    # Large tiles amortize per-step overhead (mem-bound kernel).
    tb = min(2048, _round_up(B, 8))
    # v7x megacore: keep at least 2 grid steps so the parallel axis splits
    # across both TensorCores (no-op on single-TC v5e/v6e).
    tb = min(tb, max(8, _round_up(-(-B // 2), 8)))
    # v7x VMEM guard: the class axis is untiled, so shrink the batch tile
    # until the footprint fits the budget.
    while tb > 8 and _vmem_bytes(tb, c_pad) > _VMEM_BUDGET:
        tb = max(8, _round_up(tb // 2, 8))
    return tb


def _fc_late_fusion_kernel(x_ref, w1_ref, b1_ref, w2_ref, b2_ref, out_ref):
    """One batch tile: fc1 -> LeakyReLU -> fc2 -> LogSoftmax (mask pre-baked)."""
    x = x_ref[...]                                                   # (TB, 256)

    h = jnp.dot(x, w1_ref[...], preferred_element_type=jnp.float32) + b1_ref[...]
    h = jnp.where(h >= 0, h, LEAKY_SLOPE * h)                        # LeakyReLU

    logits = (jnp.dot(h, w2_ref[...], preferred_element_type=jnp.float32)
              + b2_ref[...])                                         # (TB, Cpad)

    # Padded class columns carry ~-1e30 (from b2_p), so exp underflows to 0
    # and the LogSoftmax over the valid columns is exact without any masking.
    m = jnp.max(logits, axis=1, keepdims=True)
    e = jnp.exp(logits - m)
    lse = m + jnp.log(jnp.sum(e, axis=1, keepdims=True))
    out_ref[...] = logits - lse


def prepare_params(params, num_classes):
    """One-time padding of the weights to lane-dense MXU-friendly shapes.

    Call once (e.g. at init / checkpoint load), NOT per forward call.
    """
    c_pad = _round_up(max(num_classes, 1), 128)
    w2_p = (jnp.zeros((HIDDEN, c_pad), jnp.float32)
            .at[:, :num_classes].set(params["w2"]))
    # Bake the class mask into the padded bias columns.
    b2_p = (jnp.full((1, c_pad), NEG_SENTINEL, jnp.float32)
            .at[:, :num_classes].set(params["b2"].reshape(1, num_classes)))
    return {
        "w1": params["w1"],                                   # (256, 128)
        "b1": params["b1"].reshape(1, HIDDEN),                # (1, 128)
        "w2p": w2_p,                                          # (128, c_pad)
        "b2p": b2_p,                                          # (1, c_pad)
        "c_pad": c_pad,
    }


def fc_late_fusion_forward(x, prepared, num_classes):
    """Pallas forward pass. x: (B, 256) f32 -> (B, num_classes) log-probs."""
    B, F = x.shape
    assert F == IN_FEATURES

    c_pad = prepared["c_pad"]
    tb = _choose_batch_tile(B, c_pad)
    b_pad = _round_up(B, tb)

    # Only materialize a padded copy of x for ragged batches.
    x_in = x if b_pad == B else jnp.pad(x, ((0, b_pad - B), (0, 0)))

    out = pl.pallas_call(
        _fc_late_fusion_kernel,
        out_shape=jax.ShapeDtypeStruct((b_pad, c_pad), jnp.float32),
        grid_spec=pltpu.PrefetchScalarGridSpec(
            num_scalar_prefetch=0,
            grid=(b_pad // tb,),
            in_specs=[
                pl.BlockSpec((tb, F), lambda i: (i, 0)),            # x tile
                pl.BlockSpec((F, HIDDEN), lambda i: (0, 0)),        # W1 (resident)
                pl.BlockSpec((1, HIDDEN), lambda i: (0, 0)),        # b1 (resident)
                pl.BlockSpec((HIDDEN, c_pad), lambda i: (0, 0)),    # W2 (resident)
                pl.BlockSpec((1, c_pad), lambda i: (0, 0)),         # b2 (resident)
            ],
            out_specs=pl.BlockSpec((tb, c_pad), lambda i: (i, 0)),
        ),
        compiler_params=pltpu.CompilerParams(
            dimension_semantics=("parallel",),
            vmem_limit_bytes=32 * 1024 * 1024,
        ),
    )(x_in, prepared["w1"], prepared["b1"], prepared["w2p"], prepared["b2p"])

    return out[:B, :num_classes]


def reference_forward(x, params):
    """Pure-JAX reference matching the PyTorch module semantics."""
    h = x @ params["w1"] + params["b1"]
    h = jnp.where(h >= 0, h, LEAKY_SLOPE * h)
    logits = h @ params["w2"] + params["b2"]
    return jax.nn.log_softmax(logits, axis=1)


def init_params(key, num_classes):
    """PyTorch-style nn.Linear init: U(-1/sqrt(fan_in), 1/sqrt(fan_in)).
    Weights are stored transposed to (in_features, out_features)."""
    ks = jax.random.split(key, 4)
    s1 = 1.0 / np.sqrt(IN_FEATURES)
    s2 = 1.0 / np.sqrt(HIDDEN)
    return {
        "w1": jax.random.uniform(ks[0], (IN_FEATURES, HIDDEN), jnp.float32, -s1, s1),
        "b1": jax.random.uniform(ks[1], (HIDDEN,), jnp.float32, -s1, s1),
        "w2": jax.random.uniform(ks[2], (HIDDEN, num_classes), jnp.float32, -s2, s2),
        "b2": jax.random.uniform(ks[3], (num_classes,), jnp.float32, -s2, s2),
    }


if __name__ == "__main__":
    key = jax.random.PRNGKey(0)
    k_x, k_x2, k_p = jax.random.split(key, 3)

    num_classes = 10
    params = init_params(k_p, num_classes)
    prepared = prepare_params(params, num_classes)   # one-time padding

    # Small deterministic checks: an aligned batch and a ragged batch.
    for batch, kx in ((2, k_x), (37, k_x2)):
        x = jax.random.normal(kx, (batch, IN_FEATURES), jnp.float32)

        out = fc_late_fusion_forward(x, prepared, num_classes)
        out = jax.block_until_ready(out)

        ref = reference_forward(x, params)
        np.testing.assert_allclose(np.asarray(out), np.asarray(ref),
                                   rtol=1e-5, atol=1e-5)
        assert out.shape == (batch, num_classes)
        # log-probs must normalize: logsumexp over classes == 0
        lse = jax.scipy.special.logsumexp(out, axis=1)
        np.testing.assert_allclose(np.asarray(lse), np.zeros(batch), atol=1e-5)

    print("KERNEL_OK")
</pallas_src>

<mosaic_0001>
module attributes {stable_mosaic.version = 11 : i64} {
  func.func @_fc_late_fusion_kernel(%arg0: i32, %arg1: memref<8x256xf32, #tpu.memory_space<vmem>>, %arg2: memref<256x128xf32, #tpu.memory_space<vmem>>, %arg3: memref<1x128xf32, #tpu.memory_space<vmem>>, %arg4: memref<128x128xf32, #tpu.memory_space<vmem>>, %arg5: memref<1x128xf32, #tpu.memory_space<vmem>>, %arg6: memref<8x128xf32, #tpu.memory_space<vmem>>) attributes {dimension_semantics = [#tpu.dimension_semantics<parallel>], iteration_bounds = array<i64: 1>, scalar_prefetch = 0 : i64, scratch_operands = 0 : i64, tpu.core_type = #tpu.core_type<tc>, window_params = [{transform_indices = @transform_0, window_bounds = array<i64: 8, 256>}, {pipeline_mode = #tpu.pipeline_mode<synchronous>, transform_indices = @transform_1, window_bounds = array<i64: 256, 128>}, {pipeline_mode = #tpu.pipeline_mode<synchronous>, transform_indices = @transform_2, window_bounds = array<i64: 1, 128>}, {pipeline_mode = #tpu.pipeline_mode<synchronous>, transform_indices = @transform_3, window_bounds = array<i64: 128, 128>}, {pipeline_mode = #tpu.pipeline_mode<synchronous>, transform_indices = @transform_4, window_bounds = array<i64: 1, 128>}, {transform_indices = @transform_5, window_bounds = array<i64: 8, 128>}]} {
    %c0 = arith.constant 0 : index
    %c0_0 = arith.constant 0 : index
    %0 = vector.load %arg1[%c0, %c0_0] : memref<8x256xf32, #tpu.memory_space<vmem>>, vector<8x256xf32>
    %c0_1 = arith.constant 0 : index
    %c0_2 = arith.constant 0 : index
    %1 = vector.load %arg2[%c0_1, %c0_2] : memref<256x128xf32, #tpu.memory_space<vmem>>, vector<256x128xf32>
    %cst = arith.constant dense<0.000000e+00> : vector<8x128xf32>
    %2 = tpu.matmul %0, %1, %cst {dimension_numbers = #tpu.dot_dimension_numbers<[1], [0], [0], [1], [0, 0, 1, 1], [], []>} : vector<8x256xf32>, vector<256x128xf32>, vector<8x128xf32> -> vector<8x128xf32>
    %c0_3 = arith.constant 0 : index
    %c0_4 = arith.constant 0 : index
    %3 = vector.load %arg3[%c0_3, %c0_4] : memref<1x128xf32, #tpu.memory_space<vmem>>, vector<1x128xf32>
    %4 = vector.broadcast %3 : vector<1x128xf32> to vector<8x128xf32>
    %5 = arith.addf %2, %4 : vector<8x128xf32>
    %cst_5 = arith.constant 0.000000e+00 : f32
    %6 = vector.broadcast %cst_5 : f32 to vector<8x128xf32>
    %7 = arith.cmpf oge, %5, %6 : vector<8x128xf32>
    %cst_6 = arith.constant 0.00999999977 : f32
    %8 = vector.broadcast %cst_6 : f32 to vector<8x128xf32>
    %9 = arith.mulf %8, %5 : vector<8x128xf32>
    %10 = arith.select %7, %5, %9 : vector<8x128xi1>, vector<8x128xf32>
    %c0_7 = arith.constant 0 : index
    %c0_8 = arith.constant 0 : index
    %11 = vector.load %arg4[%c0_7, %c0_8] : memref<128x128xf32, #tpu.memory_space<vmem>>, vector<128x128xf32>
    %cst_9 = arith.constant dense<0.000000e+00> : vector<8x128xf32>
    %12 = tpu.matmul %10, %11, %cst_9 {dimension_numbers = #tpu.dot_dimension_numbers<[1], [0], [0], [1], [0, 0, 1, 1], [], []>} : vector<8x128xf32>, vector<128x128xf32>, vector<8x128xf32> -> vector<8x128xf32>
    %c0_10 = arith.constant 0 : index
    %c0_11 = arith.constant 0 : index
    %13 = vector.load %arg5[%c0_10, %c0_11] : memref<1x128xf32, #tpu.memory_space<vmem>>, vector<1x128xf32>
    %14 = vector.broadcast %13 : vector<1x128xf32> to vector<8x128xf32>
    %15 = arith.addf %12, %14 : vector<8x128xf32>
    %cst_12 = arith.constant dense<0xFF800000> : vector<8xf32>
    %16 = vector.multi_reduction <maximumf>, %15, %cst_12 [1] : vector<8x128xf32> to vector<8xf32>
    %17 = vector.shape_cast %16 : vector<8xf32> to vector<8x1xf32>
    %18 = vector.broadcast %17 : vector<8x1xf32> to vector<8x128xf32>
    %19 = arith.subf %15, %18 : vector<8x128xf32>
    %20 = math.exp %19 : vector<8x128xf32>
    %cst_13 = arith.constant dense<0.000000e+00> : vector<8xf32>
    %21 = vector.multi_reduction <add>, %20, %cst_13 [1] : vector<8x128xf32> to vector<8xf32>
    %22 = vector.shape_cast %21 : vector<8xf32> to vector<8x1xf32>
    %23 = math.log %22 : vector<8x1xf32>
    %24 = arith.addf %17, %23 : vector<8x1xf32>
    %25 = vector.broadcast %24 : vector<8x1xf32> to vector<8x128xf32>
    %26 = arith.subf %15, %25 : vector<8x128xf32>
    %c0_14 = arith.constant 0 : index
    %c0_15 = arith.constant 0 : index
    %27 = vector.load %arg6[%c0_14, %c0_15] : memref<8x128xf32, #tpu.memory_space<vmem>>, vector<8x128xf32>
    tpu.vector_store %arg6[%c0_14, %c0_15], %26 {strides = array<i32>} : memref<8x128xf32, #tpu.memory_space<vmem>>, vector<8x128xf32>,
    return
  }
  func.func @transform_0(%arg0: i32) -> (i32, i32) {
    %c0_i32 = arith.constant 0 : i32
    %c0_i32_0 = arith.constant 0 : i32
    return %arg0, %c0_i32 : i32, i32
  }
  func.func @transform_1(%arg0: i32) -> (i32, i32) {
    %c0_i32 = arith.constant 0 : i32
    %c0_i32_0 = arith.constant 0 : i32
    %c0_i32_1 = arith.constant 0 : i32
    return %c0_i32, %c0_i32_0 : i32, i32
  }
  func.func @transform_2(%arg0: i32) -> (i32, i32) {
    %c0_i32 = arith.constant 0 : i32
    %c0_i32_0 = arith.constant 0 : i32
    %c0_i32_1 = arith.constant 0 : i32
    return %c0_i32, %c0_i32_0 : i32, i32
  }
  func.func @transform_3(%arg0: i32) -> (i32, i32) {
    %c0_i32 = arith.constant 0 : i32
    %c0_i32_0 = arith.constant 0 : i32
    %c0_i32_1 = arith.constant 0 : i32
    return %c0_i32, %c0_i32_0 : i32, i32
  }
  func.func @transform_4(%arg0: i32) -> (i32, i32) {
    %c0_i32 = arith.constant 0 : i32
    %c0_i32_0 = arith.constant 0 : i32
    %c0_i32_1 = arith.constant 0 : i32
    return %c0_i32, %c0_i32_0 : i32, i32
  }
  func.func @transform_5(%arg0: i32) -> (i32, i32) {
    %c0_i32 = arith.constant 0 : i32
    %c0_i32_0 = arith.constant 0 : i32
    return %arg0, %c0_i32 : i32, i32
  }
}

</mosaic_0001>

<llo_original>
// kernel: tpu_custom_call.1
$region0: #{tpu_custom_call.1}
  #allocation0 [shape = 'u32[]', space=smem, size = 0x4, offset = 0x4, fixed_abs, tag = 'smem constant byte address 0x4 - core index']
  #allocation1 [shape = 'u32[72,128]{1,0:T(1,128)}', space=vmem, size = 0x9000, scoped, tag = 'internal scratch']
  %s0 = inlined_call_operand.hbm [shape: f32[8,256], index: 0, kind: input, shape index: {}]
  %s1 = inlined_call_operand.hbm [shape: f32[256,128], index: 1, kind: input, shape index: {}]
  %s2 = inlined_call_operand.vmem [shape: f32[1,128], index: 2, kind: input, shape index: {}]
  %s3 = inlined_call_operand.hbm [shape: f32[128,128], index: 3, kind: input, shape index: {}]
  %s4 = inlined_call_operand.vmem [shape: f32[1,128], index: 4, kind: input, shape index: {}]
  %s5 = inlined_call_operand.hbm [shape: f32[8,128], index: 5, kind: output, shape index: {}]
  %s6 = sld [smem:[#allocation0]]
  $region42: #{tpu_custom_call.1} parent=0
    _
  %s8 = ssub.s32 1, %s6
  %s9 = scalar_select 0, %s8, %s6
  $region1: #{tpu_custom_call.1} parent=0
    #allocation2 [shape = 'u8[8192]{0}', space=vmem, size = 0x2000, scoped, tag = 'input window, operand 0, single buffered']
    #allocation3 [shape = 's32[1]{0}', space=sflag, size = 0x4, scoped, tag = 'scoped memory for tpu_custom_call.1']
    #allocation4 [shape = 's32[1]{0}', space=sflag, size = 0x4, scoped, tag = 'scoped memory for tpu_custom_call.1']
    #allocation5 [shape = 'u8[131072]{0}', space=vmem, size = 0x20000, scoped, tag = 'input window, operand 1, single buffered']
    #allocation6 [shape = 's32[1]{0}', space=sflag, size = 0x4, scoped, tag = 'scoped memory for tpu_custom_call.1']
    #allocation7 [shape = 'u8[65536]{0}', space=vmem, size = 0x10000, scoped, tag = 'input window, operand 3, single buffered']
    #allocation8 [shape = 'u8[4096]{0}', space=vmem, size = 0x1000, scoped, tag = 'output window, operand 0, single buffered']
    %10 = vsyncpa [#allocation3], 0
    %11 = vsyncpa [#allocation6], 0
    %12 = vsyncpa [#allocation4], 0
    // Predicated region
    $region2: #{tpu_custom_call.1} parent=1 // pred_check
      _
    $region3: #{tpu_custom_call.1} parent=1 // pred_check_branch
      %14 = sbr.rel (0) target = $region5
    $region4: #{tpu_custom_call.1} parent=1 // pred_region
      %16 = vsyncadd [#allocation3], 0
      %s18 = sshll.u32 %s0, 4
      %s19 = int_to_ptr.hbm [resolvable:$true] %s18
      %s20 = sshll.u32 [#allocation2], 4
      %s21 = int_to_ptr.vmem [resolvable:$true] %s20
      %23 = dma.hbm_to_vmem [thread:$0]  %s19, 256, %s21, [#allocation3]
    $region5: #{tpu_custom_call.1} parent=1 // pred_fallthru
      _
    // Predicated region
    $region6: #{tpu_custom_call.1} parent=1 // pred_check
      _
    $region7: #{tpu_custom_call.1} parent=1 // pred_check_branch
      %25 = sbr.rel (0) target = $region9
    $region8: #{tpu_custom_call.1} parent=1 // pred_region
      %27 = vsyncadd [#allocation6], 0
      %s28 = sshll.u32 %s1, 4
      %s29 = int_to_ptr.hbm [resolvable:$true] %s28
      %s30 = sshll.u32 [#allocation5], 4
      %s31 = int_to_ptr.vmem [resolvable:$true] %s30
      %36 = dma.hbm_to_vmem [thread:$0]  %s29, 4096, %s31, [#allocation6], 128, 128, 8
    $region9: #{tpu_custom_call.1} parent=1 // pred_fallthru
      _
    // Predicated region
    $region10: #{tpu_custom_call.1} parent=1 // pred_check
      _
    $region11: #{tpu_custom_call.1} parent=1 // pred_check_branch
      %38 = sbr.rel (0) target = $region13
    $region12: #{tpu_custom_call.1} parent=1 // pred_region
      _
    $region13: #{tpu_custom_call.1} parent=1 // pred_fallthru
      _
    // Predicated region
    $region14: #{tpu_custom_call.1} parent=1 // pred_check
      _
    $region15: #{tpu_custom_call.1} parent=1 // pred_check_branch
      %40 = sbr.rel (0) target = $region17
    $region16: #{tpu_custom_call.1} parent=1 // pred_region
      %42 = vsyncadd [#allocation6], 0
      %s43 = sshll.u32 %s3, 4
      %s44 = int_to_ptr.hbm [resolvable:$true] %s43
      %s45 = sshll.u32 [#allocation7], 4
      %s46 = int_to_ptr.vmem [resolvable:$true] %s45
      %51 = dma.hbm_to_vmem [thread:$0]  %s44, 2048, %s46, [#allocation6], 128, 128, 8
    $region17: #{tpu_custom_call.1} parent=1 // pred_fallthru
      _
    // Predicated region
    $region18: #{tpu_custom_call.1} parent=1 // pred_check
      _
    $region19: #{tpu_custom_call.1} parent=1 // pred_check_branch
      %53 = sbr.rel (0) target = $region21
    $region20: #{tpu_custom_call.1} parent=1 // pred_region
      _
    $region21: #{tpu_custom_call.1} parent=1 // pred_fallthru
      _
    // Predicated region
    $region22: #{tpu_custom_call.1} parent=1 // pred_check
      _
    $region23: #{tpu_custom_call.1} parent=1 // pred_check_branch
      %55 = sbr.rel (0) target = $region25
    $region24: #{tpu_custom_call.1} parent=1 // pred_region
      %57 = dma.done [#allocation3], 256
    $region25: #{tpu_custom_call.1} parent=1 // pred_fallthru
      _
    // Predicated region
    $region26: #{tpu_custom_call.1} parent=1 // pred_check
      _
    $region27: #{tpu_custom_call.1} parent=1 // pred_check_branch
      %59 = sbr.rel (0) target = $region29
    $region28: #{tpu_custom_call.1} parent=1 // pred_region
      %61 = dma.done [#allocation6], 4096
    $region29: #{tpu_custom_call.1} parent=1 // pred_fallthru
      _
    // Predicated region
    $region30: #{tpu_custom_call.1} parent=1 // pred_check
      _
    $region31: #{tpu_custom_call.1} parent=1 // pred_check_branch
      %63 = sbr.rel (0) target = $region33
    $region32: #{tpu_custom_call.1} parent=1 // pred_region
      %65 = dma.done [#allocation6], 2048
    $region33: #{tpu_custom_call.1} parent=1 // pred_fallthru
      _
    %v66 = vld [vmem:[#allocation2] sm:$0xff]
    %v67 = vld [vmem:[#allocation2 + $0x8] sm:$0xff]
    %v68 = vld [vmem:[#allocation5] sm:$0xff]
    %v69 = vld [vmem:[#allocation5 + $0x8] sm:$0xff]
    %v70 = vld [vmem:[#allocation5 + $0x10] sm:$0xff]
    %v71 = vld [vmem:[#allocation5 + $0x18] sm:$0xff]
    %v72 = vld [vmem:[#allocation5 + $0x20] sm:$0xff]
    %v73 = vld [vmem:[#allocation5 + $0x28] sm:$0xff]
    %v74 = vld [vmem:[#allocation5 + $0x30] sm:$0xff]
    %v75 = vld [vmem:[#allocation5 + $0x38] sm:$0xff]
    %v76 = vld [vmem:[#allocation5 + $0x40] sm:$0xff]
    %v77 = vld [vmem:[#allocation5 + $0x48] sm:$0xff]
    %v78 = vld [vmem:[#allocation5 + $0x50] sm:$0xff]
    %v79 = vld [vmem:[#allocation5 + $0x58] sm:$0xff]
    %v80 = vld [vmem:[#allocation5 + $0x60] sm:$0xff]
    %v81 = vld [vmem:[#allocation5 + $0x68] sm:$0xff]
    %v82 = vld [vmem:[#allocation5 + $0x70] sm:$0xff]
    %v83 = vld [vmem:[#allocation5 + $0x78] sm:$0xff]
    %v84 = vld [vmem:[#allocation5 + $0x80] sm:$0xff]
    %v85 = vld [vmem:[#allocation5 + $0x88] sm:$0xff]
    %v86 = vld [vmem:[#allocation5 + $0x90] sm:$0xff]
    %v87 = vld [vmem:[#allocation5 + $0x98] sm:$0xff]
    %v88 = vld [vmem:[#allocation5 + $0xa0] sm:$0xff]
    %v89 = vld [vmem:[#allocation5 + $0xa8] sm:$0xff]
    %v90 = vld [vmem:[#allocation5 + $0xb0] sm:$0xff]
    %v91 = vld [vmem:[#allocation5 + $0xb8] sm:$0xff]
    %v92 = vld [vmem:[#allocation5 + $0xc0] sm:$0xff]
    %v93 = vld [vmem:[#allocation5 + $0xc8] sm:$0xff]
    %v94 = vld [vmem:[#allocation5 + $0xd0] sm:$0xff]
    %v95 = vld [vmem:[#allocation5 + $0xd8] sm:$0xff]
    %v96 = vld [vmem:[#allocation5 + $0xe0] sm:$0xff]
    %v97 = vld [vmem:[#allocation5 + $0xe8] sm:$0xff]
    %v98 = vld [vmem:[#allocation5 + $0xf0] sm:$0xff]
    %v99 = vld [vmem:[#allocation5 + $0xf8] sm:$0xff]
    %v100 = vld [vmem:[%s2] sm:$0x1]
    %v102 = vperm.slane %v100, 0
    %104 = vmatpush.msra.mxu0 %v83
    %105 = vmatpush.msra.mxu0 %v82
    %106 = vmatpush.msra.mxu0 %v81
    %107 = vmatpush.msra.mxu0 %v80
    %108 = vmatpush.msra.mxu0 %v79
    %109 = vmatpush.msra.mxu0 %v78
    %110 = vmatpush.msra.mxu0 %v77
    %111 = vmatpush.msra.mxu0 %v76
    %112 = vmatpush.msra.mxu0 %v75
    %113 = vmatpush.msra.mxu0 %v74
    %114 = vmatpush.msra.mxu0 %v73
    %115 = vmatpush.msra.mxu0 %v72
    %116 = vmatpush.msra.mxu0 %v71
    %117 = vmatpush.msra.mxu0 %v70
    %118 = vmatpush.msra.mxu0 %v69
    %119 = vmatpush.msra.mxu0 %v68
    %120 = vmatmul.f32.gmra.mxu0 %v66
    %v121 = vpop.f32.mrf.mxu0
    %v122 = vadd.f32 %v102, %v121
    %123 = vdwg.mxu0
    %124 = vmatpush.msra.mxu0 %v99
    %125 = vmatpush.msra.mxu0 %v98
    %126 = vmatpush.msra.mxu0 %v97
    %127 = vmatpush.msra.mxu0 %v96
    %128 = vmatpush.msra.mxu0 %v95
    %129 = vmatpush.msra.mxu0 %v94
    %130 = vmatpush.msra.mxu0 %v93
    %131 = vmatpush.msra.mxu0 %v92
    %132 = vmatpush.msra.mxu0 %v91
    %133 = vmatpush.msra.mxu0 %v90
    %134 = vmatpush.msra.mxu0 %v89
    %135 = vmatpush.msra.mxu0 %v88
    %136 = vmatpush.msra.mxu0 %v87
    %137 = vmatpush.msra.mxu0 %v86
    %138 = vmatpush.msra.mxu0 %v85
    %139 = vmatpush.msra.mxu0 %v84
    %140 = vmatmul.f32.gmra.mxu0 %v67
    %v141 = vpop.f32.mrf.mxu0
    %v142 = vadd.f32 %v122, %v141
    %143 = vdwg.mxu0
    %vm144 = vcmp.ge.f32.partialorder %v142, 0.0
    %v145 = vmul.f32 %v142, 0.01
    %v146 = vsel %vm144, %v142, %v145
    %v147 = vld [vmem:[#allocation7] sm:$0xff]
    %v148 = vld [vmem:[#allocation7 + $0x8] sm:$0xff]
    %v149 = vld [vmem:[#allocation7 + $0x10] sm:$0xff]
    %v150 = vld [vmem:[#allocation7 + $0x18] sm:$0xff]
    %v151 = vld [vmem:[#allocation7 + $0x20] sm:$0xff]
    %v152 = vld [vmem:[#allocation7 + $0x28] sm:$0xff]
    %v153 = vld [vmem:[#allocation7 + $0x30] sm:$0xff]
    %v154 = vld [vmem:[#allocation7 + $0x38] sm:$0xff]
    %v155 = vld [vmem:[#allocation7 + $0x40] sm:$0xff]
    %v156 = vld [vmem:[#allocation7 + $0x48] sm:$0xff]
    %v157 = vld [vmem:[#allocation7 + $0x50] sm:$0xff]
    %v158 = vld [vmem:[#allocation7 + $0x58] sm:$0xff]
    %v159 = vld [vmem:[#allocation7 + $0x60] sm:$0xff]
    %v160 = vld [vmem:[#allocation7 + $0x68] sm:$0xff]
    %v161 = vld [vmem:[#allocation7 + $0x70] sm:$0xff]
    %v162 = vld [vmem:[#allocation7 + $0x78] sm:$0xff]
    %v163 = vld [vmem:[%s4] sm:$0x1]
    %v165 = vperm.slane %v163, 0
    %167 = vmatpush.msra.mxu0 %v162
    %168 = vmatpush.msra.mxu0 %v161
    %169 = vmatpush.msra.mxu0 %v160
    %170 = vmatpush.msra.mxu0 %v159
    %171 = vmatpush.msra.mxu0 %v158
    %172 = vmatpush.msra.mxu0 %v157
    %173 = vmatpush.msra.mxu0 %v156
    %174 = vmatpush.msra.mxu0 %v155
    %175 = vmatpush.msra.mxu0 %v154
    %176 = vmatpush.msra.mxu0 %v153
    %177 = vmatpush.msra.mxu0 %v152
    %178 = vmatpush.msra.mxu0 %v151
    %179 = vmatpush.msra.mxu0 %v150
    %180 = vmatpush.msra.mxu0 %v149
    %181 = vmatpush.msra.mxu0 %v148
    %182 = vmatpush.msra.mxu0 %v147
    %183 = vmatmul.f32.gmra.mxu0 %v146
    %v184 = vpop.f32.mrf.mxu0
    %v185 = vadd.f32 %v165, %v184
    %186 = vdwg.mxu0
    %187 = vmax.xlane.f32.xlu0 %v185
    %v188 = vpop.xlane.xlu0 %187
    %v189 = vsub.f32 %v185, %v188
    %v190 = vmul.f32 %v189, 1.442695
    %v191 = vpow.pop %v190
    %192 = vadd.xlane.f32.xlu0 %v191
    %v193 = vpop.xlane.xlu0 %192
    %v194 = vlog2.pop %v193
    %v195 = vmul.f32 %v194, 0.6931472
    %v196 = vadd.f32 %v188, %v195
    %v197 = vsub.f32 %v185, %v196
    %198 = vst [vmem:[#allocation8] sm:$0xff] %v197
    // Predicated region
    $region34: #{tpu_custom_call.1} parent=1 // pred_check
      _
    $region35: #{tpu_custom_call.1} parent=1 // pred_check_branch
      %200 = sbr.rel (0) target = $region37
    $region36: #{tpu_custom_call.1} parent=1 // pred_region
      %202 = vsyncadd [#allocation4], 0
      %s204 = sshll.u32 [#allocation8], 4
      %s205 = int_to_ptr.vmem [resolvable:$true] %s204
      %s206 = sshll.u32 %s5, 4
      %s207 = int_to_ptr.hbm [resolvable:$true] %s206
      %209 = dma.vmem_to_hbm [thread:$0]  %s205, 128, %s207, [#allocation4]
    $region37: #{tpu_custom_call.1} parent=1 // pred_fallthru
      _
    // Predicated region
    $region38: #{tpu_custom_call.1} parent=1 // pred_check
      _
    $region39: #{tpu_custom_call.1} parent=1 // pred_check_branch
      %211 = sbr.rel (0) target = $region41
    $region40: #{tpu_custom_call.1} parent=1 // pred_region
      %213 = dma.done [#allocation4], 128
    $region41: #{tpu_custom_call.1} parent=1 // pred_fallthru
      _
    %214 = vsyncpa [#allocation3], 1
    %215 = vsyncpa [#allocation6], 1
    %216 = vsyncpa [#allocation4], 1

</llo_original>
